<compile_context>
chip_gen: v7x
topology: tpu7x:2x2x1
jax: 0.10.0
libtpu: 0.0.40
codegen_flags: <defaults>
</compile_context>

<pallas_src>
import functools

import jax
import jax.numpy as jnp
from jax.experimental import pallas as pl
from jax.experimental.pallas import tpu as pltpu


def _round_up(x, m):
    return (x + m - 1) // m * m


# --------------------- shared tiled matmul (MXU, bf16) --------------------- #

def _matmul_bias_kernel(x_ref, w_ref, b_ref, o_ref):
    acc = jnp.dot(x_ref[...].astype(jnp.bfloat16), w_ref[...],
                  preferred_element_type=jnp.float32)
    o_ref[...] = (acc + b_ref[...]).astype(o_ref.dtype)


def _matmul_kernel(x_ref, w_ref, o_ref):
    o_ref[...] = jnp.dot(x_ref[...].astype(jnp.bfloat16), w_ref[...],
                         preferred_element_type=jnp.float32).astype(o_ref.dtype)


def tiled_matmul(x, w_bf16, b=None, *, tm_cap=512, tn_cap=1024,
                 out_dtype=jnp.float32):
    """(M, K) f32 @ (K, Nout) bf16 [+ b f32] -> (M, Nout) out_dtype.

    f32 activations are read once and cast to bf16 in-kernel; weights arrive
    pre-cast to bf16.  f32 MXU accumulation.  2-D parallel grid over
    (rows, output cols); grid order picked to minimize HBM re-read traffic.
    """
    M, K = x.shape
    K2, Nout = w_bf16.shape
    assert K == K2
    assert w_bf16.dtype == jnp.bfloat16

    out_itemsize = jnp.dtype(out_dtype).itemsize
    tm = min(tm_cap, _round_up(M, 8))          # sublane-aligned row tile
    tn = min(tn_cap, _round_up(Nout, 128))     # lane-aligned output tile

    def vmem_need(tm_, tn_):
        # double-buffered x (f32), w (bf16), out; + bias
        return (2 * (tm_ * K * 4 + K * tn_ * 2 + tm_ * tn_ * out_itemsize)
                + 2 * tn_ * 4)

    budget = 40 * 1024 * 1024                  # headroom under v7x 64 MiB VMEM
    while vmem_need(tm, tn) > budget and tn > 256:
        tn //= 2
    while vmem_need(tm, tn) > budget and tm > 128:
        tm //= 2

    gm, gn = pl.cdiv(M, tm), pl.cdiv(Nout, tn)
    # Pick grid order: the operand whose block index is constant across the
    # inner axis stays VMEM-resident; the other is re-streamed per outer step.
    x_bytes, w_bytes = M * K * 4, K * Nout * 2
    cost_cols_inner = x_bytes + gm * w_bytes   # x resident per row tile
    cost_rows_inner = w_bytes + gn * x_bytes   # w resident per col tile
    if cost_cols_inner <= cost_rows_inner:
        grid = (gm, gn)
        x_map = lambda i, j: (i, 0)
        w_map = lambda i, j: (0, j)
        b_map = lambda i, j: (0, j)
        o_map = lambda i, j: (i, j)
    else:
        grid = (gn, gm)
        x_map = lambda j, i: (i, 0)
        w_map = lambda j, i: (0, j)
        b_map = lambda j, i: (0, j)
        o_map = lambda j, i: (i, j)

    in_specs = [pl.BlockSpec((tm, K), x_map),
                pl.BlockSpec((K, tn), w_map)]
    operands = [x, w_bf16]
    if b is not None:
        in_specs.append(pl.BlockSpec((1, tn), b_map))
        operands.append(b.astype(jnp.float32).reshape(1, Nout))
        kernel = _matmul_bias_kernel
    else:
        kernel = _matmul_kernel

    vmem_limit = int(min(max(vmem_need(tm, tn) + 16 * 2**20, 32 * 2**20),
                         60 * 2**20))
    return pl.pallas_call(
        kernel,
        out_shape=jax.ShapeDtypeStruct((M, Nout), out_dtype),
        grid_spec=pltpu.PrefetchScalarGridSpec(
            num_scalar_prefetch=0,
            grid=grid,
            in_specs=in_specs,
            out_specs=pl.BlockSpec((tm, tn), o_map),
        ),
        compiler_params=pltpu.CompilerParams(
            dimension_semantics=("parallel", "parallel"),
            vmem_limit_bytes=vmem_limit,
        ),
    )(*operands)


# ------------------------- LSTM recurrence kernel -------------------------- #

def _sigmoid(z):
    # Numerically safe, EUP-bound (tanh) form of the logistic function;
    # avoids the VALU-heavy f32 divide of 1/(1+exp(-z)).
    return 0.5 * jnp.tanh(0.5 * z) + 0.5


def _lstm_chunk_kernel(xg_ref, whh_ref, h_out_ref, h_sc, c_sc, *, tt, hidden):
    # xg_ref : (Tt, Nb, 4H) f32   precomputed x_t @ W_ih^T + b_ih + b_hh
    # whh_ref: (H, 4H)      bf16  recurrent weight (VMEM-resident, same block)
    # h_out  : (Tt, Nb, H)  f32   hidden states for this time chunk
    # h_sc/c_sc: (Nb, H)    f32   state carried across grid steps
    t_chunk = pl.program_id(1)

    @pl.when(t_chunk == 0)
    def _():
        h_sc[...] = jnp.zeros_like(h_sc)
        c_sc[...] = jnp.zeros_like(c_sc)

    whh = whh_ref[...]                      # bf16, stays in vregs/VMEM

    def step(t, carry):
        gates = xg_ref[t] + jnp.dot(
            h_sc[...].astype(jnp.bfloat16), whh,
            preferred_element_type=jnp.float32)
        # PyTorch gate order: i, f, g, o (lane-aligned slices, H % 128 == 0)
        i_g = _sigmoid(gates[:, 0 * hidden:1 * hidden])
        f_g = _sigmoid(gates[:, 1 * hidden:2 * hidden])
        g_g = jnp.tanh(gates[:, 2 * hidden:3 * hidden])
        o_g = _sigmoid(gates[:, 3 * hidden:4 * hidden])
        c_new = f_g * c_sc[...] + i_g * g_g
        h_new = o_g * jnp.tanh(c_new)
        c_sc[...] = c_new
        h_sc[...] = h_new
        h_out_ref[t] = h_new
        return carry

    jax.lax.fori_loop(0, tt, step, 0, unroll=True)


def lstm_recurrence(xg, w_hh_t_bf16, *, time_chunk=16, batch_chunks=1):
    """xg: (S, N, 4H) f32 gate pre-activations; w_hh_t: (H, 4H) bf16 -> (S, N, H) f32."""
    S, N, H4 = xg.shape
    H = H4 // 4
    assert w_hh_t_bf16.dtype == jnp.bfloat16
    assert N % batch_chunks == 0
    nb = N // batch_chunks
    assert nb == N or nb % 8 == 0            # sublane-clean batch blocks
    tt = min(time_chunk, S)

    kernel = functools.partial(_lstm_chunk_kernel, tt=tt, hidden=H)
    return pl.pallas_call(
        kernel,
        out_shape=jax.ShapeDtypeStruct((S, N, H), jnp.float32),
        grid_spec=pltpu.PrefetchScalarGridSpec(
            num_scalar_prefetch=0,
            grid=(batch_chunks, pl.cdiv(S, tt)),
            in_specs=[
                pl.BlockSpec((tt, nb, H4), lambda b, t: (t, b, 0)),
                pl.BlockSpec((H, H4), lambda b, t: (0, 0)),
            ],
            out_specs=pl.BlockSpec((tt, nb, H), lambda b, t: (t, b, 0)),
            scratch_shapes=[
                pltpu.VMEM((nb, H), jnp.float32),   # h carry
                pltpu.VMEM((nb, H), jnp.float32),   # c carry
            ],
        ),
        compiler_params=pltpu.CompilerParams(
            # batch axis can split across v7x's 2 TensorCores; time is serial.
            dimension_semantics=("parallel", "arbitrary"),
        ),
    )(xg, w_hh_t_bf16)


# ----------------------------- model & params ------------------------------ #

def init_params(key, *, vocab_size, emb_size, hidden_size, nlayers, pad_value):
    keys = jax.random.split(key, 1 + 4 * nlayers)
    # nn.Embedding(V, E, padding_idx=pad_value); kept f32 for the gather.
    E = 0.1 * jax.random.normal(keys[0], (vocab_size, emb_size), jnp.float32)
    E = E.at[pad_value].set(0.0)

    layers = []
    in_size = emb_size
    scale = 1.0 / (hidden_size ** 0.5)           # PyTorch LSTM init range
    for l in range(nlayers):
        k_ih, k_hh, k_bih, k_bhh = keys[1 + 4 * l: 5 + 4 * l]
        w_ih = scale * jax.random.uniform(
            k_ih, (4 * hidden_size, in_size), jnp.float32, -1.0, 1.0)
        w_hh = scale * jax.random.uniform(
            k_hh, (4 * hidden_size, hidden_size), jnp.float32, -1.0, 1.0)
        b_ih = scale * jax.random.uniform(
            k_bih, (4 * hidden_size,), jnp.float32, -1.0, 1.0)
        b_hh = scale * jax.random.uniform(
            k_bhh, (4 * hidden_size,), jnp.float32, -1.0, 1.0)
        layers.append(dict(
            # Weights pre-cast to bf16 ONCE; no per-forward HBM cast passes.
            w_ih_t=w_ih.T.astype(jnp.bfloat16),                    # (In, 4H)
            w_hh_t=w_hh.T.astype(jnp.bfloat16),                    # (H, 4H)
            bias=(b_ih + b_hh).reshape(1, 4 * hidden_size),        # f32 fused
        ))
        in_size = hidden_size

    # weight tying: W.weight = E.weight  (emb_size == hidden_size); pre-cast.
    w_out_t = E.T.astype(jnp.bfloat16)                             # (H, V)
    return dict(E=E, layers=layers, w_out_t=w_out_t)


def lstm_lm_forward(params, xinputs):
    """xinputs: (N, S) int32 token ids -> (N, S, V) f32 scores."""
    N, S = xinputs.shape
    V = params["E"].shape[0]

    # Embedding gather in plain JAX; Dropout(0.0) == identity.
    # Time-major layout so no transposes are needed between layers.
    x = params["E"][xinputs.T]                                # (S, N, E) f32

    for lp in params["layers"]:
        In, H4 = lp["w_ih_t"].shape
        # All-timestep input projection on the MXU (f32 x cast in-kernel).
        xg = tiled_matmul(x.reshape(S * N, In), lp["w_ih_t"], lp["bias"])
        xg = xg.reshape(S, N, H4)
        # Time-chunked sequential recurrence (h/c + W_hh VMEM-resident).
        x = lstm_recurrence(xg, lp["w_hh_t"])                 # (S, N, H) f32
        # Inter-layer LSTM dropout = 0.0 -> identity.

    H = x.shape[-1]
    # Reorder the SMALL (S,N,H) tensor (V/H times cheaper than transposing the
    # scores) so the tied projection emits (N,S,V) directly -- no V-sized
    # transpose pass over HBM.
    h_nsh = x.transpose(1, 0, 2).reshape(N * S, H)
    scores = tiled_matmul(h_nsh, params["w_out_t"], None)     # (N*S, V) f32
    return scores.reshape(N, S, V)


def _reference_forward(params, xinputs):
    """Pure-JAX f32 reference (same semantics as PyTorch LstmLM.forward)."""
    h_in = params["E"][xinputs]                               # (N, S, E)
    N = h_in.shape[0]
    for lp in params["layers"]:
        H = lp["w_hh_t"].shape[0]
        w_ih_t = lp["w_ih_t"].astype(jnp.float32)
        w_hh_t = lp["w_hh_t"].astype(jnp.float32)
        bias = lp["bias"]

        def step(carry, xt, w_ih_t=w_ih_t, w_hh_t=w_hh_t, bias=bias, H=H):
            h_prev, c_prev = carry
            gates = xt @ w_ih_t + bias[0] + h_prev @ w_hh_t
            i = jax.nn.sigmoid(gates[:, 0 * H:1 * H])
            f = jax.nn.sigmoid(gates[:, 1 * H:2 * H])
            g = jnp.tanh(gates[:, 2 * H:3 * H])
            o = jax.nn.sigmoid(gates[:, 3 * H:4 * H])
            c = f * c_prev + i * g
            h = o * jnp.tanh(c)
            return (h, c), h

        init = (jnp.zeros((N, H), jnp.float32), jnp.zeros((N, H), jnp.float32))
        _, h_seq = jax.lax.scan(step, init, h_in.transpose(1, 0, 2))
        h_in = h_seq.transpose(1, 0, 2)                       # (N, S, H)
    return h_in @ params["w_out_t"].astype(jnp.float32)       # (N, S, V)


# ----------------------------------- main ---------------------------------- #

if __name__ == "__main__":
    # Small, lane-aligned shapes consistent with the module
    # (weight tying requires emb_size == hidden_size).
    N, S = 2, 8
    vocab_size, emb_size, hidden_size, nlayers = 256, 128, 128, 2
    pad_value = 0

    key = jax.random.PRNGKey(0)
    k_params, k_tokens = jax.random.split(key)
    params = init_params(
        k_params,
        vocab_size=vocab_size,
        emb_size=emb_size,
        hidden_size=hidden_size,
        nlayers=nlayers,
        pad_value=pad_value,
    )
    xinputs = jax.random.randint(k_tokens, (N, S), 1, vocab_size, jnp.int32)

    out = lstm_lm_forward(params, xinputs)
    out = jax.block_until_ready(out)

    ref = _reference_forward(params, xinputs)
    assert out.shape == (N, S, vocab_size)
    # Tolerance accounts for bf16 operands (x, h, weights) with f32 MXU
    # accumulation in the kernels vs the all-f32 reference.
    max_err = float(jnp.max(jnp.abs(out - ref)))
    assert jnp.allclose(out, ref, atol=3e-2, rtol=3e-2), max_err

    print("KERNEL_OK")
</pallas_src>

<mosaic_0001>
module attributes {stable_mosaic.version = 11 : i64} {
  func.func @_matmul_bias_kernel(%arg0: i32, %arg1: i32, %arg2: memref<16x128xf32, #tpu.memory_space<vmem>>, %arg3: memref<128x512xbf16, #tpu.memory_space<vmem>>, %arg4: memref<1x512xf32, #tpu.memory_space<vmem>>, %arg5: memref<16x512xf32, #tpu.memory_space<vmem>>) attributes {dimension_semantics = [#tpu.dimension_semantics<parallel>, #tpu.dimension_semantics<parallel>], iteration_bounds = array<i64: 1, 1>, scalar_prefetch = 0 : i64, scratch_operands = 0 : i64, tpu.core_type = #tpu.core_type<tc>, window_params = [{transform_indices = @transform_0, window_bounds = array<i64: 16, 128>}, {transform_indices = @transform_1, window_bounds = array<i64: 128, 512>}, {transform_indices = @transform_2, window_bounds = array<i64: 1, 512>}, {transform_indices = @transform_3, window_bounds = array<i64: 16, 512>}]} {
    %c0 = arith.constant 0 : index
    %c0_0 = arith.constant 0 : index
    %0 = vector.load %arg2[%c0, %c0_0] : memref<16x128xf32, #tpu.memory_space<vmem>>, vector<16x128xf32>
    %1 = arith.truncf %0 : vector<16x128xf32> to vector<16x128xbf16>
    %c0_1 = arith.constant 0 : index
    %c0_2 = arith.constant 0 : index
    %2 = vector.load %arg3[%c0_1, %c0_2] : memref<128x512xbf16, #tpu.memory_space<vmem>>, vector<128x512xbf16>
    %cst = arith.constant dense<0.000000e+00> : vector<16x512xf32>
    %3 = tpu.matmul %1, %2, %cst {dimension_numbers = #tpu.dot_dimension_numbers<[1], [0], [0], [1], [0, 0, 1, 1], [], []>} : vector<16x128xbf16>, vector<128x512xbf16>, vector<16x512xf32> -> vector<16x512xf32>
    %c0_3 = arith.constant 0 : index
    %c0_4 = arith.constant 0 : index
    %4 = vector.load %arg4[%c0_3, %c0_4] : memref<1x512xf32, #tpu.memory_space<vmem>>, vector<1x512xf32>
    %5 = vector.broadcast %4 : vector<1x512xf32> to vector<16x512xf32>
    %6 = arith.addf %3, %5 : vector<16x512xf32>
    %c0_5 = arith.constant 0 : index
    %c0_6 = arith.constant 0 : index
    %7 = vector.load %arg5[%c0_5, %c0_6] : memref<16x512xf32, #tpu.memory_space<vmem>>, vector<16x512xf32>
    tpu.vector_store %arg5[%c0_5, %c0_6], %6 {strides = array<i32>} : memref<16x512xf32, #tpu.memory_space<vmem>>, vector<16x512xf32>,
    return
  }
  func.func @transform_0(%arg0: i32, %arg1: i32) -> (i32, i32) {
    %c0_i32 = arith.constant 0 : i32
    %c0_i32_0 = arith.constant 0 : i32
    return %arg0, %c0_i32 : i32, i32
  }
  func.func @transform_1(%arg0: i32, %arg1: i32) -> (i32, i32) {
    %c0_i32 = arith.constant 0 : i32
    %c0_i32_0 = arith.constant 0 : i32
    return %c0_i32, %arg1 : i32, i32
  }
  func.func @transform_2(%arg0: i32, %arg1: i32) -> (i32, i32) {
    %c0_i32 = arith.constant 0 : i32
    %c0_i32_0 = arith.constant 0 : i32
    return %c0_i32, %arg1 : i32, i32
  }
  func.func @transform_3(%arg0: i32, %arg1: i32) -> (i32, i32) {
    %c0_i32 = arith.constant 0 : i32
    return %arg0, %arg1 : i32, i32
  }
}

</mosaic_0001>

<llo_original>
// kernel: tpu_custom_call.1
$region0: #{tpu_custom_call.1}
  #allocation0 [shape = 'u32[]', space=smem, size = 0x4, offset = 0x4, fixed_abs, tag = 'smem constant byte address 0x4 - core index']
  #allocation1 [shape = 'u32[144,128]{1,0:T(1,128)}', space=vmem, size = 0x12000, scoped, tag = 'internal scratch']
  %s0 = inlined_call_operand.hbm [shape: f32[16,128], index: 0, kind: input, shape index: {}]
  %s1 = inlined_call_operand.hbm [shape: bf16[128,512], index: 1, kind: input, shape index: {}]
  %s2 = inlined_call_operand.vmem [shape: f32[1,512], index: 2, kind: input, shape index: {}]
  %s3 = inlined_call_operand.hbm [shape: f32[16,512], index: 3, kind: output, shape index: {}]
  %s4 = sld [smem:[#allocation0]]
  $region30: #{tpu_custom_call.1} parent=0
    _
  %s6 = ssub.s32 1, %s4
  %s7 = scalar_select 0, %s6, %s4
  $region1: #{tpu_custom_call.1} parent=0
    #allocation2 [shape = 'u8[8192]{0}', space=vmem, size = 0x2000, scoped, tag = 'input window, operand 0, single buffered']
    #allocation3 [shape = 's32[1]{0}', space=sflag, size = 0x4, scoped, tag = 'scoped memory for tpu_custom_call.1']
    #allocation4 [shape = 's32[1]{0}', space=sflag, size = 0x4, scoped, tag = 'scoped memory for tpu_custom_call.1']
    #allocation5 [shape = 'u8[131072]{0}', space=vmem, size = 0x20000, scoped, tag = 'input window, operand 1, single buffered']
    #allocation6 [shape = 's32[1]{0}', space=sflag, size = 0x4, scoped, tag = 'scoped memory for tpu_custom_call.1']
    #allocation7 [shape = 'u8[32768]{0}', space=vmem, size = 0x8000, scoped, tag = 'output window, operand 0, single buffered']
    %8 = vsyncpa [#allocation3], 0
    %9 = vsyncpa [#allocation6], 0
    %10 = vsyncpa [#allocation4], 0
    // Predicated region
    $region2: #{tpu_custom_call.1} parent=1 // pred_check
      _
    $region3: #{tpu_custom_call.1} parent=1 // pred_check_branch
      %12 = sbr.rel (0) target = $region5
    $region4: #{tpu_custom_call.1} parent=1 // pred_region
      %s14 = ssub.s32 256, 256
      %15 = vsyncadd [#allocation3], %s14
      %s16 = sshll.u32 [#allocation2], 4
      %s17 = int_to_ptr.vmem [resolvable:$true] %s16
      %22 = dma.hbm_to_vmem [thread:$0]  %s0, 256, %s17, [#allocation3], 128, 128, 8
    $region5: #{tpu_custom_call.1} parent=1 // pred_fallthru
      _
    // Predicated region
    $region6: #{tpu_custom_call.1} parent=1 // pred_check
      _
    $region7: #{tpu_custom_call.1} parent=1 // pred_check_branch
      %24 = sbr.rel (0) target = $region9
    $region8: #{tpu_custom_call.1} parent=1 // pred_region
      %s26 = ssub.s32 4096, 4096
      %27 = vsyncadd [#allocation6], %s26
      %s28 = sshll.u32 [#allocation5], 4
      %s29 = int_to_ptr.vmem [resolvable:$true] %s28
      %34 = dma.hbm_to_vmem [thread:$0]  %s1, 4096, %s29, [#allocation6], 256, 256, 16
    $region9: #{tpu_custom_call.1} parent=1 // pred_fallthru
      _
    // Predicated region
    $region10: #{tpu_custom_call.1} parent=1 // pred_check
      _
    $region11: #{tpu_custom_call.1} parent=1 // pred_check_branch
      %36 = sbr.rel (0) target = $region13
    $region12: #{tpu_custom_call.1} parent=1 // pred_region
      _
    $region13: #{tpu_custom_call.1} parent=1 // pred_fallthru
      _
    // Predicated region
    $region14: #{tpu_custom_call.1} parent=1 // pred_check
      _
    $region15: #{tpu_custom_call.1} parent=1 // pred_check_branch
      %38 = sbr.rel (0) target = $region17
    $region16: #{tpu_custom_call.1} parent=1 // pred_region
      %39 = dma.done [#allocation3], 256
    $region17: #{tpu_custom_call.1} parent=1 // pred_fallthru
      _
    // Predicated region
    $region18: #{tpu_custom_call.1} parent=1 // pred_check
      _
    $region19: #{tpu_custom_call.1} parent=1 // pred_check_branch
      %41 = sbr.rel (0) target = $region21
    $region20: #{tpu_custom_call.1} parent=1 // pred_region
      %42 = dma.done [#allocation6], 4096
    $region21: #{tpu_custom_call.1} parent=1 // pred_fallthru
      _
    %v44 = vld [vmem:[#allocation2] sm:$0xff]
    %v45 = vld [vmem:[#allocation2 + $0x8] sm:$0xff]
    %v46 = vpack.c.bf16 %v45, %v44
    %v47 = vld [vmem:[#allocation5] sm:$0xff]
    %v48 = vld [vmem:[#allocation5 + $0x8] sm:$0xff]
    %v49 = vld [vmem:[#allocation5 + $0x10] sm:$0xff]
    %v50 = vld [vmem:[#allocation5 + $0x18] sm:$0xff]
    %v51 = vld [vmem:[#allocation5 + $0x20] sm:$0xff]
    %v52 = vld [vmem:[#allocation5 + $0x28] sm:$0xff]
    %v53 = vld [vmem:[#allocation5 + $0x30] sm:$0xff]
    %v54 = vld [vmem:[#allocation5 + $0x38] sm:$0xff]
    %v55 = vld [vmem:[#allocation5 + $0x40] sm:$0xff]
    %v56 = vld [vmem:[#allocation5 + $0x48] sm:$0xff]
    %v57 = vld [vmem:[#allocation5 + $0x50] sm:$0xff]
    %v58 = vld [vmem:[#allocation5 + $0x58] sm:$0xff]
    %v59 = vld [vmem:[#allocation5 + $0x60] sm:$0xff]
    %v60 = vld [vmem:[#allocation5 + $0x68] sm:$0xff]
    %v61 = vld [vmem:[#allocation5 + $0x70] sm:$0xff]
    %v62 = vld [vmem:[#allocation5 + $0x78] sm:$0xff]
    %v63 = vld [vmem:[#allocation5 + $0x80] sm:$0xff]
    %v64 = vld [vmem:[#allocation5 + $0x88] sm:$0xff]
    %v65 = vld [vmem:[#allocation5 + $0x90] sm:$0xff]
    %v66 = vld [vmem:[#allocation5 + $0x98] sm:$0xff]
    %v67 = vld [vmem:[#allocation5 + $0xa0] sm:$0xff]
    %v68 = vld [vmem:[#allocation5 + $0xa8] sm:$0xff]
    %v69 = vld [vmem:[#allocation5 + $0xb0] sm:$0xff]
    %v70 = vld [vmem:[#allocation5 + $0xb8] sm:$0xff]
    %v71 = vld [vmem:[#allocation5 + $0xc0] sm:$0xff]
    %v72 = vld [vmem:[#allocation5 + $0xc8] sm:$0xff]
    %v73 = vld [vmem:[#allocation5 + $0xd0] sm:$0xff]
    %v74 = vld [vmem:[#allocation5 + $0xd8] sm:$0xff]
    %v75 = vld [vmem:[#allocation5 + $0xe0] sm:$0xff]
    %v76 = vld [vmem:[#allocation5 + $0xe8] sm:$0xff]
    %v77 = vld [vmem:[#allocation5 + $0xf0] sm:$0xff]
    %v78 = vld [vmem:[#allocation5 + $0xf8] sm:$0xff]
    %v79 = vld [vmem:[%s2] sm:$0xf]
    %v81 = vlaneseq
    %v82 = vshrl.u32 %v81, 7
    %v83 = vsub.s32 0, %v82
    %v84 = vrot.slane %v79, %v83
    %v85 = vlaneseq
    %v86 = vshrl.u32 %v85, 7
    %v87 = vsub.s32 1, %v86
    %v88 = vrot.slane %v79, %v87
    %v89 = vlaneseq
    %v90 = vshrl.u32 %v89, 7
    %v91 = vsub.s32 2, %v90
    %v92 = vrot.slane %v79, %v91
    %v93 = vlaneseq
    %v94 = vshrl.u32 %v93, 7
    %v95 = vsub.s32 3, %v94
    %v96 = vrot.slane %v79, %v95
    %v133 = vunpack.c.l.b16 %v47
    %v134 = vunpack.c.h.b16 %v47
    %v135 = vunpack.c.l.b16 %v48
    %v136 = vunpack.c.h.b16 %v48
    %v137 = vunpack.c.l.b16 %v49
    %v138 = vunpack.c.h.b16 %v49
    %v139 = vunpack.c.l.b16 %v50
    %v140 = vunpack.c.h.b16 %v50
    %v141 = vunpack.c.l.b16 %v51
    %v142 = vunpack.c.h.b16 %v51
    %v143 = vunpack.c.l.b16 %v52
    %v144 = vunpack.c.h.b16 %v52
    %v145 = vunpack.c.l.b16 %v53
    %v146 = vunpack.c.h.b16 %v53
    %v147 = vunpack.c.l.b16 %v54
    %v148 = vunpack.c.h.b16 %v54
    %v149 = vunpack.c.l.b16 %v55
    %v150 = vunpack.c.h.b16 %v55
    %v151 = vunpack.c.l.b16 %v56
    %v152 = vunpack.c.h.b16 %v56
    %v153 = vunpack.c.l.b16 %v57
    %v154 = vunpack.c.h.b16 %v57
    %v155 = vunpack.c.l.b16 %v58
    %v156 = vunpack.c.h.b16 %v58
    %v157 = vunpack.c.l.b16 %v59
    %v158 = vunpack.c.h.b16 %v59
    %v159 = vunpack.c.l.b16 %v60
    %v160 = vunpack.c.h.b16 %v60
    %v161 = vunpack.c.l.b16 %v61
    %v162 = vunpack.c.h.b16 %v61
    %v163 = vunpack.c.l.b16 %v62
    %v164 = vunpack.c.h.b16 %v62
    %v165 = vunpack.c.l.b16 %v63
    %v166 = vunpack.c.h.b16 %v63
    %v167 = vunpack.c.l.b16 %v64
    %v168 = vunpack.c.h.b16 %v64
    %v169 = vunpack.c.l.b16 %v65
    %v170 = vunpack.c.h.b16 %v65
    %v171 = vunpack.c.l.b16 %v66
    %v172 = vunpack.c.h.b16 %v66
    %v173 = vunpack.c.l.b16 %v67
    %v174 = vunpack.c.h.b16 %v67
    %v175 = vunpack.c.l.b16 %v68
    %v176 = vunpack.c.h.b16 %v68
    %v177 = vunpack.c.l.b16 %v69
    %v178 = vunpack.c.h.b16 %v69
    %v179 = vunpack.c.l.b16 %v70
    %v180 = vunpack.c.h.b16 %v70
    %v181 = vunpack.c.l.b16 %v71
    %v182 = vunpack.c.h.b16 %v71
    %v183 = vunpack.c.l.b16 %v72
    %v184 = vunpack.c.h.b16 %v72
    %v185 = vunpack.c.l.b16 %v73
    %v186 = vunpack.c.h.b16 %v73
    %v187 = vunpack.c.l.b16 %v74
    %v188 = vunpack.c.h.b16 %v74
    %v189 = vunpack.c.l.b16 %v75
    %v190 = vunpack.c.h.b16 %v75
    %v191 = vunpack.c.l.b16 %v76
    %v192 = vunpack.c.h.b16 %v76
    %v193 = vunpack.c.l.b16 %v77
    %v194 = vunpack.c.h.b16 %v77
    %v195 = vunpack.c.l.b16 %v78
    %v196 = vunpack.c.h.b16 %v78
    %v197 = vpack.c.b16 %v137, %v133
    %v198 = vpack.c.b16 %v138, %v134
    %v199 = vpack.c.b16 %v139, %v135
    %v200 = vpack.c.b16 %v140, %v136
    %v201 = vpack.c.b16 %v145, %v141
    %v202 = vpack.c.b16 %v146, %v142
    %v203 = vpack.c.b16 %v147, %v143
    %v204 = vpack.c.b16 %v148, %v144
    %v205 = vpack.c.b16 %v153, %v149
    %v206 = vpack.c.b16 %v154, %v150
    %v207 = vpack.c.b16 %v155, %v151
    %v208 = vpack.c.b16 %v156, %v152
    %v209 = vpack.c.b16 %v161, %v157
    %v210 = vpack.c.b16 %v162, %v158
    %v211 = vpack.c.b16 %v163, %v159
    %v212 = vpack.c.b16 %v164, %v160
    %v213 = vpack.c.b16 %v169, %v165
    %v214 = vpack.c.b16 %v170, %v166
    %v215 = vpack.c.b16 %v171, %v167
    %v216 = vpack.c.b16 %v172, %v168
    %v217 = vpack.c.b16 %v177, %v173
    %v218 = vpack.c.b16 %v178, %v174
    %v219 = vpack.c.b16 %v179, %v175
    %v220 = vpack.c.b16 %v180, %v176
    %v221 = vpack.c.b16 %v185, %v181
    %v222 = vpack.c.b16 %v186, %v182
    %v223 = vpack.c.b16 %v187, %v183
    %v224 = vpack.c.b16 %v188, %v184
    %v225 = vpack.c.b16 %v193, %v189
    %v226 = vpack.c.b16 %v194, %v190
    %v227 = vpack.c.b16 %v195, %v191
    %v228 = vpack.c.b16 %v196, %v192
    %261 = vmatprep.subr.bf16.mxu0 %v198
    %262 = vmatpush1.bf16.msra.mxu0 %v197
    %263 = vmatprep.subr.bf16.mxu0 %v202
    %264 = vmatpush1.bf16.msra.mxu0 %v201
    %265 = vmatprep.subr.bf16.mxu0 %v206
    %266 = vmatpush1.bf16.msra.mxu0 %v205
    %267 = vmatprep.subr.bf16.mxu0 %v210
    %268 = vmatpush1.bf16.msra.mxu0 %v209
    %269 = vmatprep.subr.bf16.mxu0 %v214
    %270 = vmatpush1.bf16.msra.mxu0 %v213
    %271 = vmatprep.subr.bf16.mxu0 %v218
    %272 = vmatpush1.bf16.msra.mxu0 %v217
    %273 = vmatprep.subr.bf16.mxu0 %v222
    %274 = vmatpush1.bf16.msra.mxu0 %v221
    %275 = vmatprep.subr.bf16.mxu0 %v226
    %276 = vmatpush1.bf16.msra.mxu0 %v225
    %277 = vmatprep.subr.bf16.mxu0 0
    %278 = vmatpush1.bf16.msra.mxu0 0
    %279 = vmatprep.subr.bf16.mxu0 0
    %280 = vmatpush1.bf16.msra.mxu0 0
    %281 = vmatprep.subr.bf16.mxu0 0
    %282 = vmatpush1.bf16.msra.mxu0 0
    %283 = vmatprep.subr.bf16.mxu0 0
    %284 = vmatpush1.bf16.msra.mxu0 0
    %285 = vmatprep.subr.bf16.mxu0 0
    %286 = vmatpush1.bf16.msra.mxu0 0
    %287 = vmatprep.subr.bf16.mxu0 0
    %288 = vmatpush1.bf16.msra.mxu0 0
    %289 = vmatprep.subr.bf16.mxu0 0
    %290 = vmatpush1.bf16.msra.mxu0 0
    %291 = vmatprep.subr.bf16.mxu0 0
    %292 = vmatpush1.bf16.msra.mxu0 0
    %293 = vmatprep.mubr.bf16.mxu0 0
    %294 = vmatmul.mubr.bf16.gmra.mrb[0].mxu0 %v46
    %v295 = vpop.f32.mrb[0].mxu0
    %v296 = vadd.f32 %v84, %v295
    %v297 = vpop.f32.mrb[0].mxu0
    %v298 = vadd.f32 %v88, %v297
    %v299 = vpop.f32.mrb[0].mxu0
    %v300 = vadd.f32 %v84, %v299
    %v301 = vpop.f32.mrb[0].mxu0
    %v302 = vadd.f32 %v88, %v301
    %303 = vdwg.mxu0
    %304 = vmatprep.subr.bf16.mxu0 %v200
    %305 = vmatpush1.bf16.msra.mxu0 %v199
    %306 = vmatprep.subr.bf16.mxu0 %v204
    %307 = vmatpush1.bf16.msra.mxu0 %v203
    %308 = vmatprep.subr.bf16.mxu0 %v208
    %309 = vmatpush1.bf16.msra.mxu0 %v207
    %310 = vmatprep.subr.bf16.mxu0 %v212
    %311 = vmatpush1.bf16.msra.mxu0 %v211
    %312 = vmatprep.subr.bf16.mxu0 %v216
    %313 = vmatpush1.bf16.msra.mxu0 %v215
    %314 = vmatprep.subr.bf16.mxu0 %v220
    %315 = vmatpush1.bf16.msra.mxu0 %v219
    %316 = vmatprep.subr.bf16.mxu0 %v224
    %317 = vmatpush1.bf16.msra.mxu0 %v223
    %318 = vmatprep.subr.bf16.mxu0 %v228
    %319 = vmatpush1.bf16.msra.mxu0 %v227
    %320 = vmatprep.subr.bf16.mxu0 0
    %321 = vmatpush1.bf16.msra.mxu0 0
    %322 = vmatprep.subr.bf16.mxu0 0
    %323 = vmatpush1.bf16.msra.mxu0 0
    %324 = vmatprep.subr.bf16.mxu0 0
    %325 = vmatpush1.bf16.msra.mxu0 0
    %326 = vmatprep.subr.bf16.mxu0 0
    %327 = vmatpush1.bf16.msra.mxu0 0
    %328 = vmatprep.subr.bf16.mxu0 0
    %329 = vmatpush1.bf16.msra.mxu0 0
    %330 = vmatprep.subr.bf16.mxu0 0
    %331 = vmatpush1.bf16.msra.mxu0 0
    %332 = vmatprep.subr.bf16.mxu0 0
    %333 = vmatpush1.bf16.msra.mxu0 0
    %334 = vmatprep.subr.bf16.mxu0 0
    %335 = vmatpush1.bf16.msra.mxu0 0
    %336 = vmatprep.mubr.bf16.mxu0 0
    %337 = vmatmul.mubr.bf16.gmra.mrb[0].mxu0 %v46
    %v338 = vpop.f32.mrb[0].mxu0
    %v339 = vadd.f32 %v92, %v338
    %v340 = vpop.f32.mrb[0].mxu0
    %v341 = vadd.f32 %v96, %v340
    %v342 = vpop.f32.mrb[0].mxu0
    %v343 = vadd.f32 %v92, %v342
    %v344 = vpop.f32.mrb[0].mxu0
    %v345 = vadd.f32 %v96, %v344
    %346 = vdwg.mxu0
    %347 = vst [vmem:[#allocation7] sm:$0xff] %v296
    %348 = vst [vmem:[#allocation7 + $0x8] sm:$0xff] %v298
    %349 = vst [vmem:[#allocation7 + $0x10] sm:$0xff] %v339
    %350 = vst [vmem:[#allocation7 + $0x18] sm:$0xff] %v341
    %351 = vst [vmem:[#allocation7 + $0x20] sm:$0xff] %v300
    %352 = vst [vmem:[#allocation7 + $0x28] sm:$0xff] %v302
    %353 = vst [vmem:[#allocation7 + $0x30] sm:$0xff] %v343
    %354 = vst [vmem:[#allocation7 + $0x38] sm:$0xff] %v345
    // Predicated region
    $region22: #{tpu_custom_call.1} parent=1 // pred_check
      _
    $region23: #{tpu_custom_call.1} parent=1 // pred_check_branch
      %356 = sbr.rel (0) target = $region25
    $region24: #{tpu_custom_call.1} parent=1 // pred_region
      %s358 = ssub.s32 1024, 1024
      %359 = vsyncadd [#allocation4], %s358
      %s360 = sshll.u32 [#allocation7], 4
      %s361 = int_to_ptr.vmem [resolvable:$true] %s360
      %366 = dma.vmem_to_hbm [thread:$0]  %s361, 1024, %s3, [#allocation4], 512, 512, 32
    $region25: #{tpu_custom_call.1} parent=1 // pred_fallthru
      _
    // Predicated region
    $region26: #{tpu_custom_call.1} parent=1 // pred_check
      _
    $region27: #{tpu_custom_call.1} parent=1 // pred_check_branch
      %368 = sbr.rel (0) target = $region29
    $region28: #{tpu_custom_call.1} parent=1 // pred_region
      %369 = dma.done [#allocation4], 1024
    $region29: #{tpu_custom_call.1} parent=1 // pred_fallthru
      _
    %370 = vsyncpa [#allocation3], 1
    %371 = vsyncpa [#allocation6], 1
    %372 = vsyncpa [#allocation4], 1

</llo_original>
